<compile_context>
chip_gen: v7x
topology: tpu7x:2x2x1
jax: 0.10.0
libtpu: 0.0.40
codegen_flags: <defaults>
</compile_context>

<pallas_src>
import functools

import jax
import jax.numpy as jnp
import numpy as np
from jax.experimental import pallas as pl
from jax.experimental.pallas import tpu as pltpu


_TILE_BUDGET_BYTES = 32 * 1024 * 1024   # per-step block budget (safe on v7x)
_VMEM_LIMIT_BYTES = 48 * 1024 * 1024    # raised scoped-VMEM cap (< 64 MiB phys)
_MAX_TILE_C = 512                       # channel tile cap (per measured sweep)


# --------------------------------------------------------------------------
# Kernels
# --------------------------------------------------------------------------
def _bn_onepass_kernel(x_ref, w_ref, b_ref, y_ref, stats_ref, *, L, eps):
    """Single pass: x_ref is (N, tile_c, HW); the full reduction row is resident."""
    x = x_ref[...].astype(jnp.float32)                 # (N, tile_c, HW)

    # Fused sum / sum-of-squares.  Collapse the cheap leading axis first (VPU
    # adds), then one lane (XLU) reduction per quantity.
    xs = jnp.sum(x, axis=0)                            # (tile_c, HW)
    xs2 = jnp.sum(x * x, axis=0)                       # (tile_c, HW)
    s = jnp.sum(xs, axis=1, keepdims=True)             # (tile_c, 1)
    sq = jnp.sum(xs2, axis=1, keepdims=True)           # (tile_c, 1)

    inv_l = 1.0 / L
    mean = s * inv_l
    # E[x^2] - mean^2 in f32, clamped >= 0 (guards catastrophic cancellation).
    var = jnp.maximum(sq * inv_l - mean * mean, 0.0)

    w = w_ref[...].astype(jnp.float32)                 # (tile_c, 1)
    b = b_ref[...].astype(jnp.float32)
    scale = jax.lax.rsqrt(var + eps) * w
    shift = b - mean * scale

    # Write-back: 2 VALU ops / element.
    y_ref[...] = (x * scale[None] + shift[None]).astype(y_ref.dtype)
    stats_ref[...] = jnp.concatenate([mean, var], axis=1)          # (tile_c, 2)


def _bn_stats_kernel(x_ref, w_ref, b_ref, stats_ref, sum_ref, sq_ref, *, L, eps):
    """Two-pass path, pass 1: accumulate sum/sumsq over the N grid axis."""
    n = pl.program_id(1)

    @pl.when(n == 0)
    def _():
        sum_ref[...] = jnp.zeros_like(sum_ref)
        sq_ref[...] = jnp.zeros_like(sq_ref)

    x = x_ref[...].astype(jnp.float32)                 # (tile_n, tile_c, HW)
    xs = jnp.sum(x, axis=0)
    xs2 = jnp.sum(x * x, axis=0)
    sum_ref[...] += jnp.sum(xs, axis=1, keepdims=True)
    sq_ref[...] += jnp.sum(xs2, axis=1, keepdims=True)

    @pl.when(n == pl.num_programs(1) - 1)
    def _():
        inv_l = 1.0 / L
        mean = sum_ref[...] * inv_l
        var = jnp.maximum(sq_ref[...] * inv_l - mean * mean, 0.0)
        w = w_ref[...].astype(jnp.float32)
        b = b_ref[...].astype(jnp.float32)
        scale = jax.lax.rsqrt(var + eps) * w
        shift = b - mean * scale
        # [mean, var, scale, shift] packed into one lane-contiguous block.
        stats_ref[...] = jnp.concatenate([mean, var, scale, shift], axis=1)


def _bn_apply_kernel(x_ref, stats_ref, y_ref):
    """Two-pass path, pass 2: y = x * scale + shift."""
    st = stats_ref[...]                                # (tile_c, 4) f32
    scale = st[:, 2:3]
    shift = st[:, 3:4]
    x = x_ref[...].astype(jnp.float32)                 # (tile_n, tile_c, HW)
    y_ref[...] = (x * scale[None] + shift[None]).astype(y_ref.dtype)


# --------------------------------------------------------------------------
# Wrapper
# --------------------------------------------------------------------------
def _choose_tile_c(BC, row_bytes):
    """Largest multiple-of-8 channel tile fitting the VMEM budget."""
    if BC % 8 != 0:
        # (8,128) rule: non-multiple-of-8 only via the full-dim exception, and
        # padding the channel axis would copy the whole tensor.
        return BC
    budget_c = int(_TILE_BUDGET_BYTES // max(row_bytes, 1))
    tile_c = max(8, (min(BC, _MAX_TILE_C, budget_c) // 8) * 8)
    # v7x megacore: keep at least two parallel channel tiles when possible.
    if tile_c == BC and BC >= 16:
        tile_c = max(8, ((BC // 2) // 8) * 8)
    return tile_c


def fused_batchnorm_train(x, weight, bias, running_mean, running_var, *,
                          eps=1e-5, momentum=0.1,
                          _force_two_pass=False, _tile_n=None):
    """Training-mode forward of hfta _BatchNorm (BatchNorm2d flavour).

    x:            [N, B, C, *spatial]
    weight, bias: [B, C]
    running_*:    [B, C]
    Returns (y, new_running_mean, new_running_var).
    """
    shape = x.shape
    N, B, C = shape[0], shape[1], shape[2]
    spatial = shape[3:]
    HW = int(np.prod(spatial)) if spatial else 1
    BC = B * C
    L = N * HW
    itemsize = np.dtype(x.dtype).itemsize

    # Free contiguous reshapes -- no transposes, no padding, no extra HBM copy.
    x3 = x.reshape(N, BC, HW)
    w2 = weight.reshape(BC, 1).astype(jnp.float32)
    b2 = bias.reshape(BC, 1).astype(jnp.float32)

    # Per-channel-row footprint: x + y blocks double-buffered plus ~2 f32 temps.
    row_bytes = N * HW * (4 * itemsize + 8)
    tile_c = _choose_tile_c(BC, row_bytes)
    num_c = pl.cdiv(BC, tile_c)
    single_pass_ok = (tile_c * row_bytes) <= _TILE_BUDGET_BYTES

    cparams_1d = pltpu.CompilerParams(
        dimension_semantics=("parallel",),
        vmem_limit_bytes=_VMEM_LIMIT_BYTES)

    if single_pass_ok and not _force_two_pass:
        # ---- single pass: 1 read + 1 write of x -------------------------
        kernel = functools.partial(_bn_onepass_kernel, L=L, eps=eps)
        y3, stats = pl.pallas_call(
            kernel,
            grid=(num_c,),
            in_specs=[
                pl.BlockSpec((N, tile_c, HW), lambda i: (0, i, 0)),
                pl.BlockSpec((tile_c, 1), lambda i: (i, 0)),
                pl.BlockSpec((tile_c, 1), lambda i: (i, 0)),
            ],
            out_specs=[
                pl.BlockSpec((N, tile_c, HW), lambda i: (0, i, 0)),
                pl.BlockSpec((tile_c, 2), lambda i: (i, 0)),
            ],
            out_shape=[
                jax.ShapeDtypeStruct((N, BC, HW), x.dtype),
                jax.ShapeDtypeStruct((BC, 2), jnp.float32),
            ],
            compiler_params=cparams_1d,
        )(x3, w2, b2)
        batch_mean = stats[:, 0]
        batch_var = stats[:, 1]
    else:
        # ---- two-pass fallback for large N*HW (fits v7x's 64 MiB VMEM) --
        if _tile_n is not None and N % _tile_n == 0:
            tile_n = _tile_n
        else:
            per_n_bytes = tile_c * HW * (4 * itemsize + 8)
            max_n = max(1, int(_TILE_BUDGET_BYTES // max(per_n_bytes, 1)))
            tile_n = 1
            for d in range(1, N + 1):           # divisor of N: no partial
                if N % d == 0 and d <= max_n:   # blocks on the reduction axis
                    tile_n = d
        num_n = N // tile_n

        stats_kernel = functools.partial(_bn_stats_kernel, L=L, eps=eps)
        stats = pl.pallas_call(
            stats_kernel,
            grid=(num_c, num_n),                # reduction axis last
            in_specs=[
                pl.BlockSpec((tile_n, tile_c, HW), lambda i, n: (n, i, 0)),
                pl.BlockSpec((tile_c, 1), lambda i, n: (i, 0)),
                pl.BlockSpec((tile_c, 1), lambda i, n: (i, 0)),
            ],
            out_specs=pl.BlockSpec((tile_c, 4), lambda i, n: (i, 0)),
            out_shape=jax.ShapeDtypeStruct((BC, 4), jnp.float32),
            scratch_shapes=[pltpu.VMEM((tile_c, 1), jnp.float32),
                            pltpu.VMEM((tile_c, 1), jnp.float32)],
            compiler_params=pltpu.CompilerParams(
                dimension_semantics=("parallel", "arbitrary"),
                vmem_limit_bytes=_VMEM_LIMIT_BYTES),
        )(x3, w2, b2)

        y3 = pl.pallas_call(
            _bn_apply_kernel,
            grid=(num_c, num_n),
            in_specs=[
                pl.BlockSpec((tile_n, tile_c, HW), lambda i, n: (n, i, 0)),
                pl.BlockSpec((tile_c, 4), lambda i, n: (i, 0)),
            ],
            out_specs=pl.BlockSpec((tile_n, tile_c, HW), lambda i, n: (n, i, 0)),
            out_shape=jax.ShapeDtypeStruct((N, BC, HW), x.dtype),
            compiler_params=pltpu.CompilerParams(
                dimension_semantics=("parallel", "parallel"),
                vmem_limit_bytes=_VMEM_LIMIT_BYTES),
        )(x3, stats)
        batch_mean = stats[:, 0]
        batch_var = stats[:, 1]

    y = y3.reshape(shape)

    # Running-stats update (a handful of BC-sized elementwise ops; matches
    # torch: biased var for normalization, unbiased for the running buffer).
    # TODO(synk): torch mutates the module buffers in place; here they are
    # returned as new arrays (no mutable module state in JAX).
    batch_mean = batch_mean.reshape(running_mean.shape)
    batch_var = batch_var.reshape(running_var.shape)
    unbiased_var = batch_var * (L / max(L - 1, 1))
    new_rm = (1.0 - momentum) * running_mean + momentum * batch_mean
    new_rv = (1.0 - momentum) * running_var + momentum * unbiased_var
    return y, new_rm, new_rv


# --------------------------------------------------------------------------
# Pure-JAX reference (F.batch_norm training-mode semantics)
# --------------------------------------------------------------------------
def _reference(x, weight, bias, running_mean, running_var, eps, momentum):
    N, B, C = x.shape[:3]
    spatial = x.shape[3:]
    BC = B * C
    L = N * (int(np.prod(spatial)) if spatial else 1)
    xf = x.reshape((N, BC) + spatial).astype(jnp.float32)
    axes = (0,) + tuple(range(2, 2 + len(spatial)))
    mean = jnp.mean(xf, axis=axes, keepdims=True)
    var = jnp.mean((xf - mean) ** 2, axis=axes, keepdims=True)
    w = weight.reshape((1, BC) + (1,) * len(spatial))
    b = bias.reshape((1, BC) + (1,) * len(spatial))
    y = ((xf - mean) * jax.lax.rsqrt(var + eps) * w + b).reshape(x.shape)
    m = mean.reshape(running_mean.shape)
    v = var.reshape(running_var.shape)
    unbiased = v * (L / max(L - 1, 1))
    new_rm = (1.0 - momentum) * running_mean + momentum * m
    new_rv = (1.0 - momentum) * running_var + momentum * unbiased
    return y.astype(x.dtype), new_rm, new_rv


if __name__ == "__main__":
    key = jax.random.PRNGKey(0)
    N, B, C, H, W = 2, 2, 4, 16, 16
    eps, momentum = 1e-5, 0.1

    x = jax.random.normal(key, (N, B, C, H, W), dtype=jnp.float32)
    # deterministic init per _NormBase.reset_parameters()
    weight = jnp.ones((B, C), dtype=jnp.float32)
    bias = jnp.zeros((B, C), dtype=jnp.float32)
    running_mean = jnp.zeros((B, C), dtype=jnp.float32)
    running_var = jnp.ones((B, C), dtype=jnp.float32)

    y_ref, rm_ref, rv_ref = _reference(x, weight, bias, running_mean,
                                       running_var, eps, momentum)

    # default (single-pass) path
    y, nrm, nrv = fused_batchnorm_train(x, weight, bias, running_mean,
                                        running_var, eps=eps, momentum=momentum)
    jax.block_until_ready((y, nrm, nrv))
    np.testing.assert_allclose(np.asarray(y), np.asarray(y_ref),
                               rtol=1e-4, atol=1e-4)
    np.testing.assert_allclose(np.asarray(nrm), np.asarray(rm_ref),
                               rtol=1e-5, atol=1e-5)
    np.testing.assert_allclose(np.asarray(nrv), np.asarray(rv_ref),
                               rtol=1e-5, atol=1e-5)

    # large-L fallback path (stats + apply), forced at small shape for coverage
    y2, nrm2, nrv2 = fused_batchnorm_train(x, weight, bias, running_mean,
                                           running_var, eps=eps,
                                           momentum=momentum,
                                           _force_two_pass=True, _tile_n=1)
    jax.block_until_ready((y2, nrm2, nrv2))
    np.testing.assert_allclose(np.asarray(y2), np.asarray(y_ref),
                               rtol=1e-4, atol=1e-4)
    np.testing.assert_allclose(np.asarray(nrm2), np.asarray(rm_ref),
                               rtol=1e-5, atol=1e-5)
    np.testing.assert_allclose(np.asarray(nrv2), np.asarray(rv_ref),
                               rtol=1e-5, atol=1e-5)

    print("KERNEL_OK")
</pallas_src>

<mosaic_0001>
module attributes {stable_mosaic.version = 11 : i64} {
  func.func @_bn_onepass_kernel(%arg0: i32, %arg1: memref<2x8x256xf32, #tpu.memory_space<vmem>>, %arg2: memref<8x1xf32, #tpu.memory_space<vmem>>, %arg3: memref<8x1xf32, #tpu.memory_space<vmem>>, %arg4: memref<2x8x256xf32, #tpu.memory_space<vmem>>, %arg5: memref<8x2xf32, #tpu.memory_space<vmem>>) attributes {dimension_semantics = [#tpu.dimension_semantics<parallel>], iteration_bounds = array<i64: 1>, scalar_prefetch = 0 : i64, scratch_operands = 0 : i64, tpu.core_type = #tpu.core_type<tc>, window_params = [{transform_indices = @transform_0, window_bounds = array<i64: 2, 8, 256>}, {transform_indices = @transform_1, window_bounds = array<i64: 8, 1>}, {transform_indices = @transform_2, window_bounds = array<i64: 8, 1>}, {transform_indices = @transform_3, window_bounds = array<i64: 2, 8, 256>}, {transform_indices = @transform_4, window_bounds = array<i64: 8, 2>}]} {
    %c0 = arith.constant 0 : index
    %c0_0 = arith.constant 0 : index
    %c0_1 = arith.constant 0 : index
    %0 = vector.load %arg1[%c0, %c0_0, %c0_1] : memref<2x8x256xf32, #tpu.memory_space<vmem>>, vector<2x8x256xf32>
    %cst = arith.constant dense<0.000000e+00> : vector<8x256xf32>
    %1 = vector.multi_reduction <add>, %0, %cst [0] : vector<2x8x256xf32> to vector<8x256xf32>
    %2 = arith.mulf %0, %0 : vector<2x8x256xf32>
    %cst_2 = arith.constant dense<0.000000e+00> : vector<8x256xf32>
    %3 = vector.multi_reduction <add>, %2, %cst_2 [0] : vector<2x8x256xf32> to vector<8x256xf32>
    %cst_3 = arith.constant dense<0.000000e+00> : vector<8xf32>
    %4 = vector.multi_reduction <add>, %1, %cst_3 [1] : vector<8x256xf32> to vector<8xf32>
    %5 = vector.shape_cast %4 : vector<8xf32> to vector<8x1xf32>
    %cst_4 = arith.constant dense<0.000000e+00> : vector<8xf32>
    %6 = vector.multi_reduction <add>, %3, %cst_4 [1] : vector<8x256xf32> to vector<8xf32>
    %7 = vector.shape_cast %6 : vector<8xf32> to vector<8x1xf32>
    %cst_5 = arith.constant 0.001953125 : f32
    %8 = vector.broadcast %cst_5 : f32 to vector<8x1xf32>
    %9 = arith.mulf %5, %8 : vector<8x1xf32>
    %cst_6 = arith.constant 0.001953125 : f32
    %10 = vector.broadcast %cst_6 : f32 to vector<8x1xf32>
    %11 = arith.mulf %7, %10 : vector<8x1xf32>
    %12 = arith.mulf %9, %9 : vector<8x1xf32>
    %13 = arith.subf %11, %12 : vector<8x1xf32>
    %cst_7 = arith.constant 0.000000e+00 : f32
    %14 = vector.broadcast %cst_7 : f32 to vector<8x1xf32>
    %15 = arith.maximumf %13, %14 : vector<8x1xf32>
    %c0_8 = arith.constant 0 : index
    %c0_9 = arith.constant 0 : index
    %16 = vector.load %arg2[%c0_8, %c0_9] : memref<8x1xf32, #tpu.memory_space<vmem>>, vector<8x1xf32>
    %c0_10 = arith.constant 0 : index
    %c0_11 = arith.constant 0 : index
    %17 = vector.load %arg3[%c0_10, %c0_11] : memref<8x1xf32, #tpu.memory_space<vmem>>, vector<8x1xf32>
    %cst_12 = arith.constant 9.99999974E-6 : f32
    %18 = vector.broadcast %cst_12 : f32 to vector<8x1xf32>
    %19 = arith.addf %15, %18 : vector<8x1xf32>
    %20 = math.rsqrt %19 : vector<8x1xf32>
    %21 = arith.mulf %20, %16 : vector<8x1xf32>
    %22 = arith.mulf %9, %21 : vector<8x1xf32>
    %23 = arith.subf %17, %22 : vector<8x1xf32>
    %24 = vector.shape_cast %21 : vector<8x1xf32> to vector<1x8x1xf32>
    %25 = vector.broadcast %24 : vector<1x8x1xf32> to vector<2x8x256xf32>
    %26 = arith.mulf %0, %25 : vector<2x8x256xf32>
    %27 = vector.shape_cast %23 : vector<8x1xf32> to vector<1x8x1xf32>
    %28 = vector.broadcast %27 : vector<1x8x1xf32> to vector<2x8x256xf32>
    %29 = arith.addf %26, %28 : vector<2x8x256xf32>
    %c0_13 = arith.constant 0 : index
    %c0_14 = arith.constant 0 : index
    %c0_15 = arith.constant 0 : index
    %30 = vector.load %arg4[%c0_13, %c0_14, %c0_15] : memref<2x8x256xf32, #tpu.memory_space<vmem>>, vector<2x8x256xf32>
    tpu.vector_store %arg4[%c0_13, %c0_14, %c0_15], %29 {strides = array<i32>} : memref<2x8x256xf32, #tpu.memory_space<vmem>>, vector<2x8x256xf32>,
    %31 = tpu.concatenate %9, %15 in 1 : vector<8x1xf32>, vector<8x1xf32> -> vector<8x2xf32>
    %c0_16 = arith.constant 0 : index
    %c0_17 = arith.constant 0 : index
    %32 = vector.load %arg5[%c0_16, %c0_17] : memref<8x2xf32, #tpu.memory_space<vmem>>, vector<8x2xf32>
    tpu.vector_store %arg5[%c0_16, %c0_17], %31 {strides = array<i32>} : memref<8x2xf32, #tpu.memory_space<vmem>>, vector<8x2xf32>,
    return
  }
  func.func @transform_0(%arg0: i32) -> (i32, i32, i32) {
    %c0_i32 = arith.constant 0 : i32
    %c0_i32_0 = arith.constant 0 : i32
    %c0_i32_1 = arith.constant 0 : i32
    return %c0_i32, %arg0, %c0_i32_0 : i32, i32, i32
  }
  func.func @transform_1(%arg0: i32) -> (i32, i32) {
    %c0_i32 = arith.constant 0 : i32
    %c0_i32_0 = arith.constant 0 : i32
    return %arg0, %c0_i32 : i32, i32
  }
  func.func @transform_2(%arg0: i32) -> (i32, i32) {
    %c0_i32 = arith.constant 0 : i32
    %c0_i32_0 = arith.constant 0 : i32
    return %arg0, %c0_i32 : i32, i32
  }
  func.func @transform_3(%arg0: i32) -> (i32, i32, i32) {
    %c0_i32 = arith.constant 0 : i32
    %c0_i32_0 = arith.constant 0 : i32
    %c0_i32_1 = arith.constant 0 : i32
    return %c0_i32, %arg0, %c0_i32_0 : i32, i32, i32
  }
  func.func @transform_4(%arg0: i32) -> (i32, i32) {
    %c0_i32 = arith.constant 0 : i32
    %c0_i32_0 = arith.constant 0 : i32
    return %arg0, %c0_i32 : i32, i32
  }
}

</mosaic_0001>

<llo_original>
// kernel: tpu_custom_call.1
$region0: #{tpu_custom_call.1}
  #allocation0 [shape = 'u32[]', space=smem, size = 0x4, offset = 0x4, fixed_abs, tag = 'smem constant byte address 0x4 - core index']
  #allocation1 [shape = 'u32[144,128]{1,0:T(1,128)}', space=vmem, size = 0x12000, scoped, tag = 'internal scratch']
  %s0 = inlined_call_operand.hbm [shape: f32[2,8,256], index: 0, kind: input, shape index: {}]
  %s1 = inlined_call_operand.vmem [shape: f32[8,1], index: 1, kind: input, shape index: {}]
  %s2 = inlined_call_operand.vmem [shape: f32[8,1], index: 2, kind: input, shape index: {}]
  %s3 = inlined_call_operand.hbm [shape: f32[2,8,256], index: 3, kind: output, shape index: {0}]
  %s4 = inlined_call_operand.vmem [shape: f32[8,2], index: 4, kind: output, shape index: {1}]
  %5 = xla_tuple %s3, %s4
  %s6 = sld [smem:[#allocation0]]
  $region34: #{tpu_custom_call.1} parent=0
    _
  %s8 = ssub.s32 1, %s6
  %s9 = scalar_select 0, %s8, %s6
  $region1: #{tpu_custom_call.1} parent=0
    #allocation2 [shape = 'u8[16384]{0}', space=vmem, size = 0x4000, scoped, tag = 'input window, operand 0, single buffered']
    #allocation3 [shape = 's32[1]{0}', space=sflag, size = 0x4, scoped, tag = 'scoped memory for tpu_custom_call.1']
    #allocation4 [shape = 's32[1]{0}', space=sflag, size = 0x4, scoped, tag = 'scoped memory for tpu_custom_call.1']
    #allocation5 [shape = 'u8[16384]{0}', space=vmem, size = 0x4000, scoped, tag = 'output window, operand 0, single buffered']
    %10 = vsyncpa [#allocation3], 0
    %11 = vsyncpa [#allocation4], 0
    // Predicated region
    $region2: #{tpu_custom_call.1} parent=1 // pred_check
      _
    $region3: #{tpu_custom_call.1} parent=1 // pred_check_branch
      %13 = sbr.rel (0) target = $region5
    $region4: #{tpu_custom_call.1} parent=1 // pred_region
      %s15 = ssub.s32 512, 512
      %16 = vsyncadd [#allocation3], %s15
      %s17 = sshll.u32 [#allocation2], 4
      %s18 = int_to_ptr.vmem [resolvable:$true] %s17
      %23 = dma.hbm_to_vmem [thread:$0]  %s0, 512, %s18, [#allocation3], 256, 256, 16
    $region5: #{tpu_custom_call.1} parent=1 // pred_fallthru
      _
    // Predicated region
    $region6: #{tpu_custom_call.1} parent=1 // pred_check
      _
    $region7: #{tpu_custom_call.1} parent=1 // pred_check_branch
      %25 = sbr.rel (0) target = $region9
    $region8: #{tpu_custom_call.1} parent=1 // pred_region
      _
    $region9: #{tpu_custom_call.1} parent=1 // pred_fallthru
      _
    // Predicated region
    $region10: #{tpu_custom_call.1} parent=1 // pred_check
      _
    $region11: #{tpu_custom_call.1} parent=1 // pred_check_branch
      %27 = sbr.rel (0) target = $region13
    $region12: #{tpu_custom_call.1} parent=1 // pred_region
      _
    $region13: #{tpu_custom_call.1} parent=1 // pred_fallthru
      _
    // Predicated region
    $region14: #{tpu_custom_call.1} parent=1 // pred_check
      _
    $region15: #{tpu_custom_call.1} parent=1 // pred_check_branch
      %29 = sbr.rel (0) target = $region17
    $region16: #{tpu_custom_call.1} parent=1 // pred_region
      %30 = dma.done [#allocation3], 512
    $region17: #{tpu_custom_call.1} parent=1 // pred_fallthru
      _
    %v31 = vld [vmem:[#allocation2] sm:$0xff]
    %v32 = vld [vmem:[#allocation2 + $0x8] sm:$0xff]
    %v33 = vld [vmem:[#allocation2 + $0x10] sm:$0xff]
    %v34 = vld [vmem:[#allocation2 + $0x18] sm:$0xff]
    %v35 = vadd.f32 %v31, %v33
    %v36 = vadd.f32 %v32, %v34
    %v37 = vmul.f32 %v31, %v31
    %v38 = vmul.f32 %v32, %v32
    %v39 = vmul.f32 %v33, %v33
    %v40 = vmul.f32 %v34, %v34
    %v41 = vadd.f32 %v37, %v39
    %v42 = vadd.f32 %v38, %v40
    %v43 = vadd.f32 %v35, %v36
    %44 = vadd.xlane.f32.xlu0 %v43
    %v45 = vpop.xlane.xlu0 %44
    %v46 = vadd.f32 %v41, %v42
    %47 = vadd.xlane.f32.xlu0 %v46
    %v48 = vpop.xlane.xlu0 %47
    %v49 = vmul.f32 %v45, 0.001953125
    %v50 = vmul.f32 %v48, 0.001953125
    %v51 = vmul.f32 %v49, %v49
    %v52 = vsub.f32 %v50, %v51
    %v53 = vmax.f32 %v52, 0.0
    %v54 = vld [vmem:[%s1] sm:$0xff]
    %v55 = vld [vmem:[%s2] sm:$0xff]
    %v56 = vadd.f32 %v53, 1e-05
    %v57 = vrsqrt.pop %v56
    %v58 = vmul.f32 %v57, %v54
    %v59 = vmul.f32 %v49, %v58
    %v60 = vsub.f32 %v55, %v59
    %62 = vset.pattern.permute.xlu0 0
    %63 = vperm.xlu0 %62, %v58
    %v64 = vpop.permute.xlu0 %63
    %v66 = vmul.f32 %v31, %v64
    %v67 = vmul.f32 %v32, %v64
    %v68 = vmul.f32 %v33, %v64
    %v69 = vmul.f32 %v34, %v64
    %71 = vset.pattern.permute.xlu0 0
    %72 = vperm.xlu0 %71, %v60
    %v73 = vpop.permute.xlu0 %72
    %v75 = vadd.f32 %v66, %v73
    %v76 = vadd.f32 %v67, %v73
    %v77 = vadd.f32 %v68, %v73
    %v78 = vadd.f32 %v69, %v73
    %79 = vst [vmem:[#allocation5] sm:$0xff] %v75
    %80 = vst [vmem:[#allocation5 + $0x8] sm:$0xff] %v76
    %81 = vst [vmem:[#allocation5 + $0x10] sm:$0xff] %v77
    %82 = vst [vmem:[#allocation5 + $0x18] sm:$0xff] %v78
    %vm83 = vcmask 7168
    %v84 = vsel %vm83, %v49, %v53
    %vm85 = vcmask 15360
    %86 = vst.msk [vmem:[%s4] sm:$0xff] %vm85, %v84
    // Predicated region
    $region18: #{tpu_custom_call.1} parent=1 // pred_check
      _
    $region19: #{tpu_custom_call.1} parent=1 // pred_check_branch
      %88 = sbr.rel (0) target = $region21
    $region20: #{tpu_custom_call.1} parent=1 // pred_region
      %s90 = ssub.s32 512, 512
      %91 = vsyncadd [#allocation4], %s90
      %s92 = sshll.u32 [#allocation5], 4
      %s93 = int_to_ptr.vmem [resolvable:$true] %s92
      %98 = dma.vmem_to_hbm [thread:$0]  %s93, 512, %s3, [#allocation4], 256, 256, 16
    $region21: #{tpu_custom_call.1} parent=1 // pred_fallthru
      _
    // Predicated region
    $region22: #{tpu_custom_call.1} parent=1 // pred_check
      _
    $region23: #{tpu_custom_call.1} parent=1 // pred_check_branch
      %100 = sbr.rel (0) target = $region25
    $region24: #{tpu_custom_call.1} parent=1 // pred_region
      _
    $region25: #{tpu_custom_call.1} parent=1 // pred_fallthru
      _
    // Predicated region
    $region26: #{tpu_custom_call.1} parent=1 // pred_check
      _
    $region27: #{tpu_custom_call.1} parent=1 // pred_check_branch
      %102 = sbr.rel (0) target = $region29
    $region28: #{tpu_custom_call.1} parent=1 // pred_region
      %103 = dma.done [#allocation4], 512
    $region29: #{tpu_custom_call.1} parent=1 // pred_fallthru
      _
    // Predicated region
    $region30: #{tpu_custom_call.1} parent=1 // pred_check
      _
    $region31: #{tpu_custom_call.1} parent=1 // pred_check_branch
      %105 = sbr.rel (0) target = $region33
    $region32: #{tpu_custom_call.1} parent=1 // pred_region
      _
    $region33: #{tpu_custom_call.1} parent=1 // pred_fallthru
      _
    %106 = vsyncpa [#allocation3], 1
    %107 = vsyncpa [#allocation4], 1

</llo_original>
